<compile_context>
chip_gen: v5e
topology: v5e:2x2
jax: 0.10.0
libtpu: 0.0.40
codegen_flags: <defaults>
</compile_context>

<pallas_src>
import jax
import jax.numpy as jnp
from jax.experimental import pallas as pl
from jax.experimental.pallas import tpu as pltpu


def _round_up(n: int, m: int) -> int:
    return ((n + m - 1) // m) * m


def mlp_kernel(x_ref, w1_ref, b1_ref, w2_ref, b2_ref, o_ref):
    # First linear: (tm, 20)bf16 @ (20, 256)bf16 -> f32 accumulator on the MXU.
    h = jnp.dot(x_ref[...], w1_ref[...], preferred_element_type=jnp.float32)
    # Bias + ReLU in f32 on the VPU (bias broadcasts from (1, 256)).
    h = jnp.maximum(h + b1_ref[...], 0.0)
    # Second linear: cast hidden to bf16 for the MXU, accumulate in f32.
    o = jnp.dot(h.astype(jnp.bfloat16), w2_ref[...],
                preferred_element_type=jnp.float32)
    o_ref[...] = (o + b2_ref[...]).astype(o_ref.dtype)


def my_sequential_forward(x, w1, b1, w2, b2, *, block_m: int = 256):
    """x: (B, 20) f32 -> (B, 10) f32.  Fused Linear->ReLU->Linear kernel.

    Weights are (in_features, out_features) (already W^T relative to torch).
    """
    B, d_in = x.shape
    d_hidden = w1.shape[1]
    d_out = w2.shape[1]

    # bf16 operands for the MXU (v6e/v7x native; f32 accumulate keeps accuracy).
    x_bf = x.astype(jnp.bfloat16)
    w1_bf = w1.astype(jnp.bfloat16)
    w2_bf = w2.astype(jnp.bfloat16)
    b1_f = b1.astype(jnp.float32)
    b2_f = b2.astype(jnp.float32)

    # Lane-dense output: pad N (10) up to a multiple of 128 so the second
    # matmul's stores are unmasked; the extra columns are zeros and sliced off.
    n_p = _round_up(d_out, 128)
    if n_p != d_out:
        w2_bf = jnp.pad(w2_bf, ((0, 0), (0, n_p - d_out)))
        b2_f = jnp.pad(b2_f, ((0, 0), (0, n_p - d_out)))

    # Batch tiling: tile size is a multiple of 16 (bf16 sublane packing),
    # capped at block_m; pad the batch up to a whole number of tiles.
    tm = min(block_m, _round_up(max(B, 1), 16))
    b_p = _round_up(B, tm)
    if b_p != B:
        x_bf = jnp.pad(x_bf, ((0, b_p - B), (0, 0)))

    grid = (b_p // tm,)

    out = pl.pallas_call(
        mlp_kernel,
        out_shape=jax.ShapeDtypeStruct((b_p, n_p), jnp.float32),
        grid=grid,
        in_specs=[
            pl.BlockSpec((tm, d_in), lambda i: (i, 0)),        # x: tiled over batch
            pl.BlockSpec((d_in, d_hidden), lambda i: (0, 0)),  # W1: VMEM-resident
            pl.BlockSpec((1, d_hidden), lambda i: (0, 0)),     # b1: VMEM-resident
            pl.BlockSpec((d_hidden, n_p), lambda i: (0, 0)),   # W2: VMEM-resident
            pl.BlockSpec((1, n_p), lambda i: (0, 0)),          # b2: VMEM-resident
        ],
        out_specs=pl.BlockSpec((tm, n_p), lambda i: (i, 0)),
        compiler_params=pltpu.CompilerParams(
            dimension_semantics=("parallel",),  # batch axis -> both TCs on v7x
        ),
    )(x_bf, w1_bf, b1_f, w2_bf, b2_f)

    return out[:B, :d_out]


def _init_linear(key, fan_in, fan_out):
    # Mimic torch.nn.Linear default init: U(-1/sqrt(fan_in), 1/sqrt(fan_in)).
    kw, kb = jax.random.split(key)
    bound = 1.0 / jnp.sqrt(float(fan_in))
    # Stored as (fan_in, fan_out) == W^T so the kernel does x @ w directly.
    w = jax.random.uniform(kw, (fan_in, fan_out), jnp.float32, -bound, bound)
    b = jax.random.uniform(kb, (1, fan_out), jnp.float32, -bound, bound)
    return w, b


if __name__ == "__main__":
    key = jax.random.PRNGKey(0)
    k_x, k_l1, k_l2 = jax.random.split(key, 3)

    batch, d_in, d_hidden, d_out = 2, 20, 256, 10
    x = jax.random.normal(k_x, (batch, d_in), jnp.float32)
    w1, b1 = _init_linear(k_l1, d_in, d_hidden)
    w2, b2 = _init_linear(k_l2, d_hidden, d_out)

    out = my_sequential_forward(x, w1, b1, w2, b2)
    out = jax.block_until_ready(out)
    assert out.shape == (batch, d_out)

    # Reference with the same bf16-in / f32-accumulate precision as the kernel.
    ref_bf = jnp.dot(
        jnp.maximum(
            jnp.dot(x.astype(jnp.bfloat16), w1.astype(jnp.bfloat16),
                    preferred_element_type=jnp.float32) + b1, 0.0
        ).astype(jnp.bfloat16),
        w2.astype(jnp.bfloat16),
        preferred_element_type=jnp.float32,
    ) + b2
    assert jnp.allclose(out, ref_bf, atol=1e-3, rtol=1e-3)

    # Loose sanity check against the full-f32 reference (module semantics).
    ref_f32 = jnp.maximum(x @ w1 + b1, 0.0) @ w2 + b2
    assert jnp.allclose(out, ref_f32, atol=5e-2, rtol=5e-2)

    print("KERNEL_OK")
</pallas_src>

<mosaic_0001>
module attributes {stable_mosaic.version = 11 : i64} {
  func.func @mlp_kernel(%arg0: i32, %arg1: memref<16x20xbf16, #tpu.memory_space<vmem>>, %arg2: memref<20x256xbf16, #tpu.memory_space<vmem>>, %arg3: memref<1x256xf32, #tpu.memory_space<vmem>>, %arg4: memref<256x128xbf16, #tpu.memory_space<vmem>>, %arg5: memref<1x128xf32, #tpu.memory_space<vmem>>, %arg6: memref<16x128xf32, #tpu.memory_space<vmem>>) attributes {dimension_semantics = [#tpu.dimension_semantics<parallel>], iteration_bounds = array<i64: 1>, scalar_prefetch = 0 : i64, scratch_operands = 0 : i64, tpu.core_type = #tpu.core_type<tc>, window_params = [{transform_indices = @transform_0, window_bounds = array<i64: 16, 20>}, {pipeline_mode = #tpu.pipeline_mode<synchronous>, transform_indices = @transform_1, window_bounds = array<i64: 20, 256>}, {pipeline_mode = #tpu.pipeline_mode<synchronous>, transform_indices = @transform_2, window_bounds = array<i64: 1, 256>}, {pipeline_mode = #tpu.pipeline_mode<synchronous>, transform_indices = @transform_3, window_bounds = array<i64: 256, 128>}, {pipeline_mode = #tpu.pipeline_mode<synchronous>, transform_indices = @transform_4, window_bounds = array<i64: 1, 128>}, {transform_indices = @transform_5, window_bounds = array<i64: 16, 128>}]} {
    %c0 = arith.constant 0 : index
    %c0_0 = arith.constant 0 : index
    %0 = vector.load %arg1[%c0, %c0_0] : memref<16x20xbf16, #tpu.memory_space<vmem>>, vector<16x20xbf16>
    %c0_1 = arith.constant 0 : index
    %c0_2 = arith.constant 0 : index
    %1 = vector.load %arg2[%c0_1, %c0_2] : memref<20x256xbf16, #tpu.memory_space<vmem>>, vector<20x256xbf16>
    %cst = arith.constant dense<0.000000e+00> : vector<16x256xf32>
    %2 = tpu.matmul %0, %1, %cst {dimension_numbers = #tpu.dot_dimension_numbers<[1], [0], [0], [1], [0, 0, 1, 1], [], []>} : vector<16x20xbf16>, vector<20x256xbf16>, vector<16x256xf32> -> vector<16x256xf32>
    %c0_3 = arith.constant 0 : index
    %c0_4 = arith.constant 0 : index
    %3 = vector.load %arg3[%c0_3, %c0_4] : memref<1x256xf32, #tpu.memory_space<vmem>>, vector<1x256xf32>
    %4 = vector.broadcast %3 : vector<1x256xf32> to vector<16x256xf32>
    %5 = arith.addf %2, %4 : vector<16x256xf32>
    %cst_5 = arith.constant 0.000000e+00 : f32
    %6 = vector.broadcast %cst_5 : f32 to vector<16x256xf32>
    %7 = arith.maximumf %5, %6 : vector<16x256xf32>
    %8 = arith.truncf %7 : vector<16x256xf32> to vector<16x256xbf16>
    %c0_6 = arith.constant 0 : index
    %c0_7 = arith.constant 0 : index
    %9 = vector.load %arg4[%c0_6, %c0_7] : memref<256x128xbf16, #tpu.memory_space<vmem>>, vector<256x128xbf16>
    %cst_8 = arith.constant dense<0.000000e+00> : vector<16x128xf32>
    %10 = tpu.matmul %8, %9, %cst_8 {dimension_numbers = #tpu.dot_dimension_numbers<[1], [0], [0], [1], [0, 0, 1, 1], [], []>} : vector<16x256xbf16>, vector<256x128xbf16>, vector<16x128xf32> -> vector<16x128xf32>
    %c0_9 = arith.constant 0 : index
    %c0_10 = arith.constant 0 : index
    %11 = vector.load %arg5[%c0_9, %c0_10] : memref<1x128xf32, #tpu.memory_space<vmem>>, vector<1x128xf32>
    %12 = vector.broadcast %11 : vector<1x128xf32> to vector<16x128xf32>
    %13 = arith.addf %10, %12 : vector<16x128xf32>
    %c0_11 = arith.constant 0 : index
    %c0_12 = arith.constant 0 : index
    %14 = vector.load %arg6[%c0_11, %c0_12] : memref<16x128xf32, #tpu.memory_space<vmem>>, vector<16x128xf32>
    tpu.vector_store %arg6[%c0_11, %c0_12], %13 {strides = array<i32>} : memref<16x128xf32, #tpu.memory_space<vmem>>, vector<16x128xf32>,
    return
  }
  func.func @transform_0(%arg0: i32) -> (i32, i32) {
    %c0_i32 = arith.constant 0 : i32
    %c0_i32_0 = arith.constant 0 : i32
    return %arg0, %c0_i32 : i32, i32
  }
  func.func @transform_1(%arg0: i32) -> (i32, i32) {
    %c0_i32 = arith.constant 0 : i32
    %c0_i32_0 = arith.constant 0 : i32
    %c0_i32_1 = arith.constant 0 : i32
    return %c0_i32, %c0_i32_0 : i32, i32
  }
  func.func @transform_2(%arg0: i32) -> (i32, i32) {
    %c0_i32 = arith.constant 0 : i32
    %c0_i32_0 = arith.constant 0 : i32
    %c0_i32_1 = arith.constant 0 : i32
    return %c0_i32, %c0_i32_0 : i32, i32
  }
  func.func @transform_3(%arg0: i32) -> (i32, i32) {
    %c0_i32 = arith.constant 0 : i32
    %c0_i32_0 = arith.constant 0 : i32
    %c0_i32_1 = arith.constant 0 : i32
    return %c0_i32, %c0_i32_0 : i32, i32
  }
  func.func @transform_4(%arg0: i32) -> (i32, i32) {
    %c0_i32 = arith.constant 0 : i32
    %c0_i32_0 = arith.constant 0 : i32
    %c0_i32_1 = arith.constant 0 : i32
    return %c0_i32, %c0_i32_0 : i32, i32
  }
  func.func @transform_5(%arg0: i32) -> (i32, i32) {
    %c0_i32 = arith.constant 0 : i32
    %c0_i32_0 = arith.constant 0 : i32
    return %arg0, %c0_i32 : i32, i32
  }
}

</mosaic_0001>

<llo_original>
// kernel: tpu_custom_call.1
$region0: #{tpu_custom_call.1}
  #allocation0 [shape = 'u32[]', space=smem, size = 0x4, offset = 0x4, fixed_abs, tag = 'smem constant byte address 0x4 - core index']
  #allocation1 [shape = 'u32[72,128]{1,0:T(1,128)}', space=vmem, size = 0x9000, scoped, tag = 'internal scratch']
  %s0 = inlined_call_operand.hbm [shape: bf16[16,20], index: 0, kind: input, shape index: {}]
  %s1 = inlined_call_operand.hbm [shape: bf16[20,256], index: 1, kind: input, shape index: {}]
  %s2 = inlined_call_operand.hbm [shape: f32[1,256], index: 2, kind: input, shape index: {}]
  %s3 = inlined_call_operand.hbm [shape: bf16[256,128], index: 3, kind: input, shape index: {}]
  %s4 = inlined_call_operand.vmem [shape: f32[1,128], index: 4, kind: input, shape index: {}]
  %s5 = inlined_call_operand.hbm [shape: f32[16,128], index: 5, kind: output, shape index: {}]
  %s6 = sld [smem:[#allocation0]]
  $region46: #{tpu_custom_call.1} parent=0
    _
  %s8 = ssub.s32 1, %s6
  %s9 = scalar_select 0, %s8, %s6
  $region1: #{tpu_custom_call.1} parent=0
    #allocation2 [shape = 'u8[4096]{0}', space=vmem, size = 0x1000, scoped, tag = 'input window, operand 0, single buffered']
    #allocation3 [shape = 's32[1]{0}', space=sflag, size = 0x4, scoped, tag = 'scoped memory for tpu_custom_call.1']
    #allocation4 [shape = 's32[1]{0}', space=sflag, size = 0x4, scoped, tag = 'scoped memory for tpu_custom_call.1']
    #allocation5 [shape = 'u8[12288]{0}', space=vmem, size = 0x3000, scoped, tag = 'input window, operand 1, single buffered']
    #allocation6 [shape = 's32[1]{0}', space=sflag, size = 0x4, scoped, tag = 'scoped memory for tpu_custom_call.1']
    #allocation7 [shape = 'u8[1024]{0}', space=vmem, size = 0x400, scoped, tag = 'input window, operand 2, single buffered']
    #allocation8 [shape = 'u8[65536]{0}', space=vmem, size = 0x10000, scoped, tag = 'input window, operand 3, single buffered']
    #allocation9 [shape = 's32[1]{0}', space=sflag, size = 0x4, scoped, tag = 'scoped memory for tpu_custom_call.1']
    #allocation10 [shape = 'u8[8192]{0}', space=vmem, size = 0x2000, scoped, tag = 'output window, operand 0, single buffered']
    %10 = vsyncpa [#allocation3], 0
    %11 = vsyncpa [#allocation6], 0
    %12 = vsyncpa [#allocation9], 0
    %13 = vsyncpa [#allocation4], 0
    // Predicated region
    $region2: #{tpu_custom_call.1} parent=1 // pred_check
      _
    $region3: #{tpu_custom_call.1} parent=1 // pred_check_branch
      %15 = sbr.rel (0) target = $region5
    $region4: #{tpu_custom_call.1} parent=1 // pred_region
      %17 = vsyncadd [#allocation3], 0
      %s18 = sshll.u32 %s0, 4
      %s19 = int_to_ptr.hbm [resolvable:$true] %s18
      %s20 = sshll.u32 [#allocation2], 4
      %s21 = int_to_ptr.vmem [resolvable:$true] %s20
      %26 = dma.hbm_to_vmem [thread:$0]  %s19, 128, %s21, [#allocation3], 64, 64, 4
    $region5: #{tpu_custom_call.1} parent=1 // pred_fallthru
      _
    // Predicated region
    $region6: #{tpu_custom_call.1} parent=1 // pred_check
      _
    $region7: #{tpu_custom_call.1} parent=1 // pred_check_branch
      %28 = sbr.rel (0) target = $region9
    $region8: #{tpu_custom_call.1} parent=1 // pred_region
      %30 = vsyncadd [#allocation6], 0
      %s31 = sshll.u32 %s1, 4
      %s32 = int_to_ptr.hbm [resolvable:$true] %s31
      %s33 = sshll.u32 [#allocation5], 4
      %s34 = int_to_ptr.vmem [resolvable:$true] %s33
      %39 = dma.hbm_to_vmem [thread:$0]  %s32, 384, %s34, [#allocation6], 128, 128, 8
    $region9: #{tpu_custom_call.1} parent=1 // pred_fallthru
      _
    // Predicated region
    $region10: #{tpu_custom_call.1} parent=1 // pred_check
      _
    $region11: #{tpu_custom_call.1} parent=1 // pred_check_branch
      %41 = sbr.rel (0) target = $region13
    $region12: #{tpu_custom_call.1} parent=1 // pred_region
      %43 = vsyncadd [#allocation6], 0
      %s45 = sshll.u32 %s2, 4
      %s46 = int_to_ptr.hbm [resolvable:$true] %s45
      %s47 = sshll.u32 [#allocation7], 4
      %s48 = int_to_ptr.vmem [resolvable:$true] %s47
      %50 = dma.hbm_to_vmem [thread:$0]  %s46, 32, %s48, [#allocation6]
    $region13: #{tpu_custom_call.1} parent=1 // pred_fallthru
      _
    // Predicated region
    $region14: #{tpu_custom_call.1} parent=1 // pred_check
      _
    $region15: #{tpu_custom_call.1} parent=1 // pred_check_branch
      %52 = sbr.rel (0) target = $region17
    $region16: #{tpu_custom_call.1} parent=1 // pred_region
      %54 = vsyncadd [#allocation9], 0
      %s55 = sshll.u32 %s3, 4
      %s56 = int_to_ptr.hbm [resolvable:$true] %s55
      %s57 = sshll.u32 [#allocation8], 4
      %s58 = int_to_ptr.vmem [resolvable:$true] %s57
      %63 = dma.hbm_to_vmem [thread:$0]  %s56, 2048, %s58, [#allocation9], 64, 64, 4
    $region17: #{tpu_custom_call.1} parent=1 // pred_fallthru
      _
    // Predicated region
    $region18: #{tpu_custom_call.1} parent=1 // pred_check
      _
    $region19: #{tpu_custom_call.1} parent=1 // pred_check_branch
      %65 = sbr.rel (0) target = $region21
    $region20: #{tpu_custom_call.1} parent=1 // pred_region
      _
    $region21: #{tpu_custom_call.1} parent=1 // pred_fallthru
      _
    // Predicated region
    $region22: #{tpu_custom_call.1} parent=1 // pred_check
      _
    $region23: #{tpu_custom_call.1} parent=1 // pred_check_branch
      %67 = sbr.rel (0) target = $region25
    $region24: #{tpu_custom_call.1} parent=1 // pred_region
      %69 = dma.done [#allocation3], 128
    $region25: #{tpu_custom_call.1} parent=1 // pred_fallthru
      _
    // Predicated region
    $region26: #{tpu_custom_call.1} parent=1 // pred_check
      _
    $region27: #{tpu_custom_call.1} parent=1 // pred_check_branch
      %71 = sbr.rel (0) target = $region29
    $region28: #{tpu_custom_call.1} parent=1 // pred_region
      %73 = dma.done [#allocation6], 384
    $region29: #{tpu_custom_call.1} parent=1 // pred_fallthru
      _
    // Predicated region
    $region30: #{tpu_custom_call.1} parent=1 // pred_check
      _
    $region31: #{tpu_custom_call.1} parent=1 // pred_check_branch
      %75 = sbr.rel (0) target = $region33
    $region32: #{tpu_custom_call.1} parent=1 // pred_region
      %77 = dma.done [#allocation6], 32
    $region33: #{tpu_custom_call.1} parent=1 // pred_fallthru
      _
    // Predicated region
    $region34: #{tpu_custom_call.1} parent=1 // pred_check
      _
    $region35: #{tpu_custom_call.1} parent=1 // pred_check_branch
      %79 = sbr.rel (0) target = $region37
    $region36: #{tpu_custom_call.1} parent=1 // pred_region
      %81 = dma.done [#allocation9], 2048
    $region37: #{tpu_custom_call.1} parent=1 // pred_fallthru
      _
    %v83 = vld [vmem:[#allocation2] sm:$0xf]
    %v84 = vld [vmem:[#allocation2 + $0x4] sm:$0xf]
    %v85 = vld [vmem:[#allocation5] sm:$0xff]
    %v86 = vld [vmem:[#allocation5 + $0x8] sm:$0xff]
    %v87 = vld [vmem:[#allocation5 + $0x10] sm:$0x33]
    %v88 = vld [vmem:[#allocation7] sm:$0x3]
    %v90 = vperm.slane %v88, 0
    %v91 = vperm.slane %v88, 1
    %v96 = vunpack.c.l.b16 %v83
    %v97 = vunpack.c.l.b16 %v84
    %v98 = vpack.c.b16 %v97, %v96
    %v102 = vunpack.c.l.b16 %v85
    %v103 = vunpack.c.h.b16 %v85
    %v104 = vunpack.c.l.b16 %v86
    %v105 = vunpack.c.h.b16 %v86
    %v106 = vunpack.c.l.b16 %v87
    %v107 = vunpack.c.h.b16 %v87
    %v108 = vpack.c.b16 %v104, %v102
    %v109 = vpack.c.b16 %v105, %v103
    %v110 = vpack.c.b16 %v106, %v106
    %v111 = vpack.c.b16 %v107, %v107
    %vm114 = vcmask 162816
    %v116 = vsel %vm114, %v98, 0
    %vm118 = vcmask 1041408
    %v120 = vsel %vm118, %v110, 0
    %v123 = vsel %vm118, %v111, 0
    %125 = vmatpush.bf16.msra.mxu0 0
    %126 = vmatpush.bf16.msra.mxu0 0
    %127 = vmatpush.bf16.msra.mxu0 0
    %128 = vmatpush.bf16.msra.mxu0 0
    %129 = vmatpush.bf16.msra.mxu0 0
    %130 = vmatpush.bf16.msra.mxu0 0
    %131 = vmatpush.bf16.msra.mxu0 %v120
    %132 = vmatpush.bf16.msra.mxu0 %v108
    %133 = vmatmul.bf16.gmra.mxu0 %v116
    %v134 = vpop.f32.mrf.mxu0
    %v135 = vadd.f32 %v90, %v134
    %v136 = vpop.f32.mrf.mxu0
    %v137 = vadd.f32 %v90, %v136
    %138 = vdwg.mxu0
    %139 = vmatpush.bf16.msra.mxu0 0
    %140 = vmatpush.bf16.msra.mxu0 0
    %141 = vmatpush.bf16.msra.mxu0 0
    %142 = vmatpush.bf16.msra.mxu0 0
    %143 = vmatpush.bf16.msra.mxu0 0
    %144 = vmatpush.bf16.msra.mxu0 0
    %145 = vmatpush.bf16.msra.mxu0 %v123
    %146 = vmatpush.bf16.msra.mxu0 %v109
    %147 = vmatmul.bf16.gmra.mxu0 %v116
    %v148 = vpop.f32.mrf.mxu0
    %v149 = vadd.f32 %v91, %v148
    %v150 = vpop.f32.mrf.mxu0
    %v151 = vadd.f32 %v91, %v150
    %152 = vdwg.mxu0
    %v153 = vmax.f32 %v135, 0.0
    %v154 = vmax.f32 %v149, 0.0
    %v155 = vmax.f32 %v137, 0.0
    %v156 = vmax.f32 %v151, 0.0
    %v157 = vpack.c.bf16 %v155, %v153
    %v158 = vpack.c.bf16 %v156, %v154
    %v159 = vld [vmem:[#allocation8] sm:$0xf]
    %v160 = vld [vmem:[#allocation8 + $0x4] sm:$0xf]
    %v161 = vld [vmem:[#allocation8 + $0x8] sm:$0xf]
    %v162 = vld [vmem:[#allocation8 + $0xc] sm:$0xf]
    %v163 = vld [vmem:[#allocation8 + $0x10] sm:$0xf]
    %v164 = vld [vmem:[#allocation8 + $0x14] sm:$0xf]
    %v165 = vld [vmem:[#allocation8 + $0x18] sm:$0xf]
    %v166 = vld [vmem:[#allocation8 + $0x1c] sm:$0xf]
    %v167 = vld [vmem:[#allocation8 + $0x20] sm:$0xf]
    %v168 = vld [vmem:[#allocation8 + $0x24] sm:$0xf]
    %v169 = vld [vmem:[#allocation8 + $0x28] sm:$0xf]
    %v170 = vld [vmem:[#allocation8 + $0x2c] sm:$0xf]
    %v171 = vld [vmem:[#allocation8 + $0x30] sm:$0xf]
    %v172 = vld [vmem:[#allocation8 + $0x34] sm:$0xf]
    %v173 = vld [vmem:[#allocation8 + $0x38] sm:$0xf]
    %v174 = vld [vmem:[#allocation8 + $0x3c] sm:$0xf]
    %v175 = vld [vmem:[#allocation8 + $0x40] sm:$0xf]
    %v176 = vld [vmem:[#allocation8 + $0x44] sm:$0xf]
    %v177 = vld [vmem:[#allocation8 + $0x48] sm:$0xf]
    %v178 = vld [vmem:[#allocation8 + $0x4c] sm:$0xf]
    %v179 = vld [vmem:[#allocation8 + $0x50] sm:$0xf]
    %v180 = vld [vmem:[#allocation8 + $0x54] sm:$0xf]
    %v181 = vld [vmem:[#allocation8 + $0x58] sm:$0xf]
    %v182 = vld [vmem:[#allocation8 + $0x5c] sm:$0xf]
    %v183 = vld [vmem:[#allocation8 + $0x60] sm:$0xf]
    %v184 = vld [vmem:[#allocation8 + $0x64] sm:$0xf]
    %v185 = vld [vmem:[#allocation8 + $0x68] sm:$0xf]
    %v186 = vld [vmem:[#allocation8 + $0x6c] sm:$0xf]
    %v187 = vld [vmem:[#allocation8 + $0x70] sm:$0xf]
    %v188 = vld [vmem:[#allocation8 + $0x74] sm:$0xf]
    %v189 = vld [vmem:[#allocation8 + $0x78] sm:$0xf]
    %v190 = vld [vmem:[#allocation8 + $0x7c] sm:$0xf]
    %v191 = vld [vmem:[%s4] sm:$0x1]
    %v193 = vperm.slane %v191, 0
    %v227 = vunpack.c.l.b16 %v159
    %v228 = vunpack.c.l.b16 %v160
    %v229 = vunpack.c.l.b16 %v161
    %v230 = vunpack.c.l.b16 %v162
    %v231 = vunpack.c.l.b16 %v163
    %v232 = vunpack.c.l.b16 %v164
    %v233 = vunpack.c.l.b16 %v165
    %v234 = vunpack.c.l.b16 %v166
    %v235 = vunpack.c.l.b16 %v167
    %v236 = vunpack.c.l.b16 %v168
    %v237 = vunpack.c.l.b16 %v169
    %v238 = vunpack.c.l.b16 %v170
    %v239 = vunpack.c.l.b16 %v171
    %v240 = vunpack.c.l.b16 %v172
    %v241 = vunpack.c.l.b16 %v173
    %v242 = vunpack.c.l.b16 %v174
    %v243 = vunpack.c.l.b16 %v175
    %v244 = vunpack.c.l.b16 %v176
    %v245 = vunpack.c.l.b16 %v177
    %v246 = vunpack.c.l.b16 %v178
    %v247 = vunpack.c.l.b16 %v179
    %v248 = vunpack.c.l.b16 %v180
    %v249 = vunpack.c.l.b16 %v181
    %v250 = vunpack.c.l.b16 %v182
    %v251 = vunpack.c.l.b16 %v183
    %v252 = vunpack.c.l.b16 %v184
    %v253 = vunpack.c.l.b16 %v185
    %v254 = vunpack.c.l.b16 %v186
    %v255 = vunpack.c.l.b16 %v187
    %v256 = vunpack.c.l.b16 %v188
    %v257 = vunpack.c.l.b16 %v189
    %v258 = vunpack.c.l.b16 %v190
    %v259 = vpack.c.b16 %v228, %v227
    %v260 = vpack.c.b16 %v230, %v229
    %v261 = vpack.c.b16 %v232, %v231
    %v262 = vpack.c.b16 %v234, %v233
    %v263 = vpack.c.b16 %v236, %v235
    %v264 = vpack.c.b16 %v238, %v237
    %v265 = vpack.c.b16 %v240, %v239
    %v266 = vpack.c.b16 %v242, %v241
    %v267 = vpack.c.b16 %v244, %v243
    %v268 = vpack.c.b16 %v246, %v245
    %v269 = vpack.c.b16 %v248, %v247
    %v270 = vpack.c.b16 %v250, %v249
    %v271 = vpack.c.b16 %v252, %v251
    %v272 = vpack.c.b16 %v254, %v253
    %v273 = vpack.c.b16 %v256, %v255
    %v274 = vpack.c.b16 %v258, %v257
    %291 = vmatpush.bf16.msra.mxu0 %v266
    %292 = vmatpush.bf16.msra.mxu0 %v265
    %293 = vmatpush.bf16.msra.mxu0 %v264
    %294 = vmatpush.bf16.msra.mxu0 %v263
    %295 = vmatpush.bf16.msra.mxu0 %v262
    %296 = vmatpush.bf16.msra.mxu0 %v261
    %297 = vmatpush.bf16.msra.mxu0 %v260
    %298 = vmatpush.bf16.msra.mxu0 %v259
    %299 = vmatmul.bf16.gmra.mxu0 %v157
    %v300 = vpop.f32.mrf.mxu0
    %v301 = vadd.f32 %v193, %v300
    %v302 = vpop.f32.mrf.mxu0
    %v303 = vadd.f32 %v193, %v302
    %304 = vdwg.mxu0
    %305 = vmatpush.bf16.msra.mxu0 %v274
    %306 = vmatpush.bf16.msra.mxu0 %v273
    %307 = vmatpush.bf16.msra.mxu0 %v272
    %308 = vmatpush.bf16.msra.mxu0 %v271
    %309 = vmatpush.bf16.msra.mxu0 %v270
    %310 = vmatpush.bf16.msra.mxu0 %v269
    %311 = vmatpush.bf16.msra.mxu0 %v268
    %312 = vmatpush.bf16.msra.mxu0 %v267
    %313 = vmatmul.bf16.gmra.mxu0 %v158
    %v314 = vpop.f32.mrf.mxu0
    %v315 = vadd.f32 %v301, %v314
    %v316 = vpop.f32.mrf.mxu0
    %v317 = vadd.f32 %v303, %v316
    %318 = vdwg.mxu0
    %319 = vst [vmem:[#allocation10] sm:$0xff] %v315
    %320 = vst [vmem:[#allocation10 + $0x8] sm:$0xff] %v317
    // Predicated region
    $region38: #{tpu_custom_call.1} parent=1 // pred_check
      _
    $region39: #{tpu_custom_call.1} parent=1 // pred_check_branch
      %322 = sbr.rel (0) target = $region41
    $region40: #{tpu_custom_call.1} parent=1 // pred_region
      %324 = vsyncadd [#allocation4], 0
      %s325 = sshll.u32 [#allocation10], 4
      %s326 = int_to_ptr.vmem [resolvable:$true] %s325
      %s327 = sshll.u32 %s5, 4
      %s328 = int_to_ptr.hbm [resolvable:$true] %s327
      %333 = dma.vmem_to_hbm [thread:$0]  %s326, 256, %s328, [#allocation4], 128, 128, 8
    $region41: #{tpu_custom_call.1} parent=1 // pred_fallthru
      _
    // Predicated region
    $region42: #{tpu_custom_call.1} parent=1 // pred_check
      _
    $region43: #{tpu_custom_call.1} parent=1 // pred_check_branch
      %335 = sbr.rel (0) target = $region45
    $region44: #{tpu_custom_call.1} parent=1 // pred_region
      %337 = dma.done [#allocation4], 256
    $region45: #{tpu_custom_call.1} parent=1 // pred_fallthru
      _
    %338 = vsyncpa [#allocation3], 1
    %339 = vsyncpa [#allocation6], 1
    %340 = vsyncpa [#allocation9], 1
    %341 = vsyncpa [#allocation4], 1

</llo_original>
